<compile_context>
chip_gen: v7x
topology: tpu7x:2x2x1
jax: 0.10.0
libtpu: 0.0.40
codegen_flags: <defaults>
</compile_context>

<pallas_src>
import functools

import jax
import jax.numpy as jnp
from jax.experimental import pallas as pl
from jax.experimental.pallas import tpu as pltpu


def _round_up(n, m):
    return ((n + m - 1) // m) * m


def _vq_kernel(x_ref, w_ref, z2_ref, vq_ref, *, use_bf16_matmul):
    x = x_ref[...].astype(jnp.float32)       # [TN, D]
    w = w_ref[...].astype(jnp.float32)       # [K,  D]
    z2 = z2_ref[...]                         # [1,  K]  precomputed ||z||^2

    if use_bf16_matmul:
        # Faster MXU path on v6e/v7x (distance precision slightly reduced).
        xm = x.astype(jnp.bfloat16)
        wm = w.astype(jnp.bfloat16)
    else:
        xm = x
        wm = w

    # x @ w.T on the MXU.
    xz = jax.lax.dot_general(xm, wm, (((1,), (1,)), ((), ())),
                             preferred_element_type=jnp.float32)   # [TN, K]

    # argmin_k ||x - z_k||^2 == argmin_k (||z_k||^2 - 2 x.z_k); the per-row
    # constant ||x||^2 is dropped (does not change the argmin).
    d = z2 - 2.0 * xz
    idx = jnp.argmin(d, axis=1)                                    # [TN]

    # Gather codewords via a one-hot matmul (MXU-friendly gather, exact in f32).
    onehot = (jax.lax.broadcasted_iota(jnp.int32, d.shape, 1)
              == idx[:, None]).astype(jnp.float32)                 # [TN, K]
    vq = jnp.dot(onehot, w, preferred_element_type=jnp.float32)    # [TN, D]

    # Straight-through: forward value of x + (vq - x).detach() is just vq.
    vq_ref[...] = vq.astype(vq_ref.dtype)


def vector_quantize(x, embed_weight, beta=0.25, gamma=1.0, tn=256,
                    use_bf16_matmul=False):
    """Returns (vq_x, loss) matching VectorQuantizer.forward(require_loss=True)."""
    N, D = x.shape
    K, D2 = embed_weight.shape
    assert D == D2

    # Row tile: large enough to fill the MXU, clamped to the (8-aligned) batch.
    tn_eff = min(tn, _round_up(N, 8))
    n_pad = _round_up(N, tn_eff)
    x_in = x if n_pad == N else jnp.pad(x, ((0, n_pad - N), (0, 0)))

    # Hoist ||z||^2 out of the kernel (the codebook is constant across tiles).
    z2 = jnp.sum(embed_weight.astype(jnp.float32) ** 2, axis=1)[None, :]  # [1, K]

    kernel = functools.partial(_vq_kernel, use_bf16_matmul=use_bf16_matmul)

    grid_spec = pltpu.PrefetchScalarGridSpec(
        num_scalar_prefetch=0,
        grid=(n_pad // tn_eff,),
        in_specs=[
            pl.BlockSpec((tn_eff, D), lambda i: (i, 0)),   # x row-tile
            pl.BlockSpec((K, D), lambda i: (0, 0)),        # full codebook (constant)
            pl.BlockSpec((1, K), lambda i: (0, 0)),        # precomputed ||z||^2
        ],
        out_specs=pl.BlockSpec((tn_eff, D), lambda i: (i, 0)),
    )

    # Rough per-step VMEM working-set estimate: double-buffered ins/outs plus
    # the [tn, K] intermediates; raise the scoped limit only when needed and
    # cap at 64 MiB (v7x physical VMEM per TensorCore).
    x_item = jnp.dtype(x.dtype).itemsize
    w_item = jnp.dtype(embed_weight.dtype).itemsize
    est = (2 * tn_eff * D * x_item            # x (double-buffered)
           + 2 * tn_eff * D * x_item          # vq out (double-buffered)
           + 2 * K * D * w_item               # codebook (double-buffered)
           + 2 * K * 4                        # z2
           + 4 * tn_eff * K * 4)              # xz / d / one-hot intermediates
    vmem_limit = None
    if est > 24 * 1024 * 1024:
        vmem_limit = min(int(est * 1.5), 64 * 1024 * 1024)

    vq_x = pl.pallas_call(
        kernel,
        grid_spec=grid_spec,
        out_shape=jax.ShapeDtypeStruct((n_pad, D), x.dtype),
        compiler_params=pltpu.CompilerParams(
            dimension_semantics=("parallel",),   # no cross-tile state -> megacore OK
            vmem_limit_bytes=vmem_limit),
    )(x_in, embed_weight, z2)

    if n_pad != N:
        vq_x = vq_x[:N]

    # Loss outside the kernel: both MSE terms share the same forward value,
    # so loss = mse * (beta + gamma).  Keeps the grid axis parallel and uses
    # XLA's precise mean reduction.
    diff = x.astype(jnp.float32) - vq_x.astype(jnp.float32)
    mse = jnp.mean(diff * diff)
    loss = mse * (beta + gamma)
    return vq_x, loss


def _reference(x, w, beta=0.25, gamma=1.0):
    x2 = jnp.sum(x ** 2, axis=1, keepdims=True)
    z2 = jnp.sum(w ** 2, axis=1)
    xz = x @ w.T
    d = x2 + z2 - 2.0 * xz
    idx = jnp.argmin(d, axis=1)
    vq_x = w[idx]
    mse = jnp.mean((x - vq_x) ** 2)
    return vq_x, mse * beta + mse * gamma


if __name__ == "__main__":
    key = jax.random.PRNGKey(0)
    kx, kw = jax.random.split(key)

    # Small-shape instantiation of VectorQuantizer(num=256, dim=128); batch of 32 vectors.
    N, D, K = 32, 128, 256
    x = jax.random.normal(kx, (N, D), dtype=jnp.float32)
    # embed.weight initialized with uniform_(-1, 1), as in the module's __init__.
    embed_weight = jax.random.uniform(kw, (K, D), dtype=jnp.float32,
                                      minval=-1.0, maxval=1.0)

    vq_x, loss = vector_quantize(x, embed_weight, beta=0.25, gamma=1.0)
    jax.block_until_ready((vq_x, loss))

    vq_ref, loss_ref = _reference(x, embed_weight)
    assert jnp.allclose(vq_x, vq_ref, atol=1e-5, rtol=1e-5)
    assert jnp.allclose(loss, loss_ref, atol=1e-5, rtol=1e-5)

    print("KERNEL_OK")
</pallas_src>

<mosaic_0001>
module attributes {stable_mosaic.version = 11 : i64} {
  func.func @_vq_kernel(%arg0: i32, %arg1: memref<32x128xf32, #tpu.memory_space<vmem>>, %arg2: memref<256x128xf32, #tpu.memory_space<vmem>>, %arg3: memref<1x256xf32, #tpu.memory_space<vmem>>, %arg4: memref<32x128xf32, #tpu.memory_space<vmem>>) attributes {dimension_semantics = [#tpu.dimension_semantics<parallel>], iteration_bounds = array<i64: 1>, scalar_prefetch = 0 : i64, scratch_operands = 0 : i64, tpu.core_type = #tpu.core_type<tc>, window_params = [{transform_indices = @transform_0, window_bounds = array<i64: 32, 128>}, {pipeline_mode = #tpu.pipeline_mode<synchronous>, transform_indices = @transform_1, window_bounds = array<i64: 256, 128>}, {pipeline_mode = #tpu.pipeline_mode<synchronous>, transform_indices = @transform_2, window_bounds = array<i64: 1, 256>}, {transform_indices = @transform_3, window_bounds = array<i64: 32, 128>}]} {
    %c0 = arith.constant 0 : index
    %c0_0 = arith.constant 0 : index
    %0 = vector.load %arg1[%c0, %c0_0] : memref<32x128xf32, #tpu.memory_space<vmem>>, vector<32x128xf32>
    %c0_1 = arith.constant 0 : index
    %c0_2 = arith.constant 0 : index
    %1 = vector.load %arg2[%c0_1, %c0_2] : memref<256x128xf32, #tpu.memory_space<vmem>>, vector<256x128xf32>
    %c0_3 = arith.constant 0 : index
    %c0_4 = arith.constant 0 : index
    %2 = vector.load %arg3[%c0_3, %c0_4] : memref<1x256xf32, #tpu.memory_space<vmem>>, vector<1x256xf32>
    %cst = arith.constant dense<0.000000e+00> : vector<32x256xf32>
    %3 = tpu.matmul %0, %1, %cst {dimension_numbers = #tpu.dot_dimension_numbers<[1], [1], [0], [0], [0, 0, 1, 0], [], []>} : vector<32x128xf32>, vector<256x128xf32>, vector<32x256xf32> -> vector<32x256xf32>
    %cst_5 = arith.constant 2.000000e+00 : f32
    %4 = vector.broadcast %cst_5 : f32 to vector<32x256xf32>
    %5 = arith.mulf %4, %3 : vector<32x256xf32>
    %6 = vector.broadcast %2 : vector<1x256xf32> to vector<32x256xf32>
    %7 = arith.subf %6, %5 : vector<32x256xf32>
    %8 = tpu.reduce_index %7 {axis = 1 : i32, kind = #tpu.reduction_kind<arg_min>} : vector<32x256xf32> -> vector<32xi32>
    %9 = tpu.iota {dimensions = array<i32: 1>} : vector<32x256xi32>
    %10 = vector.shape_cast %8 : vector<32xi32> to vector<32x1xi32>
    %11 = vector.broadcast %10 : vector<32x1xi32> to vector<32x256xi32>
    %12 = arith.cmpi eq, %9, %11 : vector<32x256xi32>
    %13 = arith.extui %12 : vector<32x256xi1> to vector<32x256xi32>
    %14 = arith.sitofp %13 : vector<32x256xi32> to vector<32x256xf32>
    %cst_6 = arith.constant dense<0.000000e+00> : vector<32x128xf32>
    %15 = tpu.matmul %14, %1, %cst_6 {dimension_numbers = #tpu.dot_dimension_numbers<[1], [0], [0], [1], [0, 0, 1, 1], [], []>} : vector<32x256xf32>, vector<256x128xf32>, vector<32x128xf32> -> vector<32x128xf32>
    %c0_7 = arith.constant 0 : index
    %c0_8 = arith.constant 0 : index
    %16 = vector.load %arg4[%c0_7, %c0_8] : memref<32x128xf32, #tpu.memory_space<vmem>>, vector<32x128xf32>
    tpu.vector_store %arg4[%c0_7, %c0_8], %15 {strides = array<i32>} : memref<32x128xf32, #tpu.memory_space<vmem>>, vector<32x128xf32>,
    return
  }
  func.func @transform_0(%arg0: i32) -> (i32, i32) {
    %c0_i32 = arith.constant 0 : i32
    %c0_i32_0 = arith.constant 0 : i32
    return %arg0, %c0_i32 : i32, i32
  }
  func.func @transform_1(%arg0: i32) -> (i32, i32) {
    %c0_i32 = arith.constant 0 : i32
    %c0_i32_0 = arith.constant 0 : i32
    %c0_i32_1 = arith.constant 0 : i32
    return %c0_i32, %c0_i32_0 : i32, i32
  }
  func.func @transform_2(%arg0: i32) -> (i32, i32) {
    %c0_i32 = arith.constant 0 : i32
    %c0_i32_0 = arith.constant 0 : i32
    %c0_i32_1 = arith.constant 0 : i32
    return %c0_i32, %c0_i32_0 : i32, i32
  }
  func.func @transform_3(%arg0: i32) -> (i32, i32) {
    %c0_i32 = arith.constant 0 : i32
    %c0_i32_0 = arith.constant 0 : i32
    return %arg0, %c0_i32 : i32, i32
  }
}

</mosaic_0001>

<llo_original>
// kernel: tpu_custom_call.1
$region0: #{tpu_custom_call.1}
  #allocation0 [shape = 'u32[]', space=smem, size = 0x4, offset = 0x4, fixed_abs, tag = 'smem constant byte address 0x4 - core index']
  #allocation1 [shape = 'u32[144,128]{1,0:T(1,128)}', space=vmem, size = 0x12000, scoped, tag = 'internal scratch']
  %s0 = inlined_call_operand.hbm [shape: f32[32,128], index: 0, kind: input, shape index: {}]
  %s1 = inlined_call_operand.hbm [shape: f32[256,128], index: 1, kind: input, shape index: {}]
  %s2 = inlined_call_operand.vmem [shape: f32[1,256], index: 2, kind: input, shape index: {}]
  %s3 = inlined_call_operand.hbm [shape: f32[32,128], index: 3, kind: output, shape index: {}]
  %s4 = sld [smem:[#allocation0]]
  $region30: #{tpu_custom_call.1} parent=0
    _
  %s6 = ssub.s32 1, %s4
  %s7 = scalar_select 0, %s6, %s4
  $region1: #{tpu_custom_call.1} parent=0
    #allocation2 [shape = 'u8[16384]{0}', space=vmem, size = 0x4000, scoped, tag = 'input window, operand 0, single buffered']
    #allocation3 [shape = 's32[1]{0}', space=sflag, size = 0x4, scoped, tag = 'scoped memory for tpu_custom_call.1']
    #allocation4 [shape = 's32[1]{0}', space=sflag, size = 0x4, scoped, tag = 'scoped memory for tpu_custom_call.1']
    #allocation5 [shape = 'u8[131072]{0}', space=vmem, size = 0x20000, scoped, tag = 'input window, operand 1, single buffered']
    #allocation6 [shape = 's32[1]{0}', space=sflag, size = 0x4, scoped, tag = 'scoped memory for tpu_custom_call.1']
    #allocation7 [shape = 'u8[16384]{0}', space=vmem, size = 0x4000, scoped, tag = 'output window, operand 0, single buffered']
    %8 = vsyncpa [#allocation3], 0
    %9 = vsyncpa [#allocation6], 0
    %10 = vsyncpa [#allocation4], 0
    // Predicated region
    $region2: #{tpu_custom_call.1} parent=1 // pred_check
      _
    $region3: #{tpu_custom_call.1} parent=1 // pred_check_branch
      %12 = sbr.rel (0) target = $region5
    $region4: #{tpu_custom_call.1} parent=1 // pred_region
      %s14 = ssub.s32 512, 512
      %15 = vsyncadd [#allocation3], %s14
      %s16 = sshll.u32 [#allocation2], 4
      %s17 = int_to_ptr.vmem [resolvable:$true] %s16
      %22 = dma.hbm_to_vmem [thread:$0]  %s0, 512, %s17, [#allocation3], 128, 128, 8
    $region5: #{tpu_custom_call.1} parent=1 // pred_fallthru
      _
    // Predicated region
    $region6: #{tpu_custom_call.1} parent=1 // pred_check
      _
    $region7: #{tpu_custom_call.1} parent=1 // pred_check_branch
      %24 = sbr.rel (0) target = $region9
    $region8: #{tpu_custom_call.1} parent=1 // pred_region
      %s26 = ssub.s32 4096, 4096
      %27 = vsyncadd [#allocation6], %s26
      %s28 = sshll.u32 [#allocation5], 4
      %s29 = int_to_ptr.vmem [resolvable:$true] %s28
      %34 = dma.hbm_to_vmem [thread:$0]  %s1, 4096, %s29, [#allocation6], 128, 128, 8
    $region9: #{tpu_custom_call.1} parent=1 // pred_fallthru
      _
    // Predicated region
    $region10: #{tpu_custom_call.1} parent=1 // pred_check
      _
    $region11: #{tpu_custom_call.1} parent=1 // pred_check_branch
      %36 = sbr.rel (0) target = $region13
    $region12: #{tpu_custom_call.1} parent=1 // pred_region
      _
    $region13: #{tpu_custom_call.1} parent=1 // pred_fallthru
      _
    // Predicated region
    $region14: #{tpu_custom_call.1} parent=1 // pred_check
      _
    $region15: #{tpu_custom_call.1} parent=1 // pred_check_branch
      %38 = sbr.rel (0) target = $region17
    $region16: #{tpu_custom_call.1} parent=1 // pred_region
      %39 = dma.done [#allocation3], 512
    $region17: #{tpu_custom_call.1} parent=1 // pred_fallthru
      _
    // Predicated region
    $region18: #{tpu_custom_call.1} parent=1 // pred_check
      _
    $region19: #{tpu_custom_call.1} parent=1 // pred_check_branch
      %41 = sbr.rel (0) target = $region21
    $region20: #{tpu_custom_call.1} parent=1 // pred_region
      %42 = dma.done [#allocation6], 4096
    $region21: #{tpu_custom_call.1} parent=1 // pred_fallthru
      _
    %v43 = vld [vmem:[#allocation2] sm:$0xff]
    %v44 = vld [vmem:[#allocation2 + $0x8] sm:$0xff]
    %v45 = vld [vmem:[#allocation2 + $0x10] sm:$0xff]
    %v46 = vld [vmem:[#allocation2 + $0x18] sm:$0xff]
    %v47 = vld [vmem:[#allocation5] sm:$0xff]
    %v48 = vld [vmem:[#allocation5 + $0x8] sm:$0xff]
    %v49 = vld [vmem:[#allocation5 + $0x10] sm:$0xff]
    %v50 = vld [vmem:[#allocation5 + $0x18] sm:$0xff]
    %v51 = vld [vmem:[#allocation5 + $0x20] sm:$0xff]
    %v52 = vld [vmem:[#allocation5 + $0x28] sm:$0xff]
    %v53 = vld [vmem:[#allocation5 + $0x30] sm:$0xff]
    %v54 = vld [vmem:[#allocation5 + $0x38] sm:$0xff]
    %v55 = vld [vmem:[#allocation5 + $0x40] sm:$0xff]
    %v56 = vld [vmem:[#allocation5 + $0x48] sm:$0xff]
    %v57 = vld [vmem:[#allocation5 + $0x50] sm:$0xff]
    %v58 = vld [vmem:[#allocation5 + $0x58] sm:$0xff]
    %v59 = vld [vmem:[#allocation5 + $0x60] sm:$0xff]
    %v60 = vld [vmem:[#allocation5 + $0x68] sm:$0xff]
    %v61 = vld [vmem:[#allocation5 + $0x70] sm:$0xff]
    %v62 = vld [vmem:[#allocation5 + $0x78] sm:$0xff]
    %v63 = vld [vmem:[#allocation5 + $0x80] sm:$0xff]
    %v64 = vld [vmem:[#allocation5 + $0x88] sm:$0xff]
    %v65 = vld [vmem:[#allocation5 + $0x90] sm:$0xff]
    %v66 = vld [vmem:[#allocation5 + $0x98] sm:$0xff]
    %v67 = vld [vmem:[#allocation5 + $0xa0] sm:$0xff]
    %v68 = vld [vmem:[#allocation5 + $0xa8] sm:$0xff]
    %v69 = vld [vmem:[#allocation5 + $0xb0] sm:$0xff]
    %v70 = vld [vmem:[#allocation5 + $0xb8] sm:$0xff]
    %v71 = vld [vmem:[#allocation5 + $0xc0] sm:$0xff]
    %v72 = vld [vmem:[#allocation5 + $0xc8] sm:$0xff]
    %v73 = vld [vmem:[#allocation5 + $0xd0] sm:$0xff]
    %v74 = vld [vmem:[#allocation5 + $0xd8] sm:$0xff]
    %v75 = vld [vmem:[#allocation5 + $0xe0] sm:$0xff]
    %v76 = vld [vmem:[#allocation5 + $0xe8] sm:$0xff]
    %v77 = vld [vmem:[#allocation5 + $0xf0] sm:$0xff]
    %v78 = vld [vmem:[#allocation5 + $0xf8] sm:$0xff]
    %v79 = vld [vmem:[%s2] sm:$0x3]
    %80 = vmatprep.subr.mxu0 0.0
    %81 = vmatpush1.xpose.msra.mxu0 %v47
    %82 = vmatprep.subr.mxu0 0.0
    %83 = vmatpush1.xpose.msra.mxu0 %v48
    %84 = vmatprep.subr.mxu0 0.0
    %85 = vmatpush1.xpose.msra.mxu0 %v49
    %86 = vmatprep.subr.mxu0 0.0
    %87 = vmatpush1.xpose.msra.mxu0 %v50
    %88 = vmatprep.subr.mxu0 0.0
    %89 = vmatpush1.xpose.msra.mxu0 %v51
    %90 = vmatprep.subr.mxu0 0.0
    %91 = vmatpush1.xpose.msra.mxu0 %v52
    %92 = vmatprep.subr.mxu0 0.0
    %93 = vmatpush1.xpose.msra.mxu0 %v53
    %94 = vmatprep.subr.mxu0 0.0
    %95 = vmatpush1.xpose.msra.mxu0 %v54
    %96 = vmatprep.subr.mxu0 0.0
    %97 = vmatpush1.xpose.msra.mxu0 %v55
    %98 = vmatprep.subr.mxu0 0.0
    %99 = vmatpush1.xpose.msra.mxu0 %v56
    %100 = vmatprep.subr.mxu0 0.0
    %101 = vmatpush1.xpose.msra.mxu0 %v57
    %102 = vmatprep.subr.mxu0 0.0
    %103 = vmatpush1.xpose.msra.mxu0 %v58
    %104 = vmatprep.subr.mxu0 0.0
    %105 = vmatpush1.xpose.msra.mxu0 %v59
    %106 = vmatprep.subr.mxu0 0.0
    %107 = vmatpush1.xpose.msra.mxu0 %v60
    %108 = vmatprep.subr.mxu0 0.0
    %109 = vmatpush1.xpose.msra.mxu0 %v61
    %110 = vmatprep.subr.mxu0 0.0
    %111 = vmatpush1.xpose.msra.mxu0 %v62
    %112 = vmatprep.subr.mxu0 0.0
    %113 = vmatpush1.xpose.msra.mxu0 %v63
    %114 = vmatprep.subr.mxu0 0.0
    %115 = vmatpush1.xpose.msra.mxu0 %v64
    %116 = vmatprep.subr.mxu0 0.0
    %117 = vmatpush1.xpose.msra.mxu0 %v65
    %118 = vmatprep.subr.mxu0 0.0
    %119 = vmatpush1.xpose.msra.mxu0 %v66
    %120 = vmatprep.subr.mxu0 0.0
    %121 = vmatpush1.xpose.msra.mxu0 %v67
    %122 = vmatprep.subr.mxu0 0.0
    %123 = vmatpush1.xpose.msra.mxu0 %v68
    %124 = vmatprep.subr.mxu0 0.0
    %125 = vmatpush1.xpose.msra.mxu0 %v69
    %126 = vmatprep.subr.mxu0 0.0
    %127 = vmatpush1.xpose.msra.mxu0 %v70
    %128 = vmatprep.subr.mxu0 0.0
    %129 = vmatpush1.xpose.msra.mxu0 %v71
    %130 = vmatprep.subr.mxu0 0.0
    %131 = vmatpush1.xpose.msra.mxu0 %v72
    %132 = vmatprep.subr.mxu0 0.0
    %133 = vmatpush1.xpose.msra.mxu0 %v73
    %134 = vmatprep.subr.mxu0 0.0
    %135 = vmatpush1.xpose.msra.mxu0 %v74
    %136 = vmatprep.subr.mxu0 0.0
    %137 = vmatpush1.xpose.msra.mxu0 %v75
    %138 = vmatprep.subr.mxu0 0.0
    %139 = vmatpush1.xpose.msra.mxu0 %v76
    %140 = vmatprep.subr.mxu0 0.0
    %141 = vmatpush1.xpose.msra.mxu0 %v77
    %142 = vmatprep.subr.mxu0 0.0
    %143 = vmatpush1.xpose.msra.mxu0 %v78
    %144 = vmatprep.mubr.f32.mxu0 0.0
    %145 = vmatmul.mubr.f32.gmra.mrb[0].mxu0 %v43
    %v146 = vpop.f32.mrb[0].mxu0
    %v147 = vadd.f32 0.0, %v146
    %v148 = vpop.f32.mrb[0].mxu0
    %v149 = vadd.f32 0.0, %v148
    %150 = vmatprep.mubr.f32.mxu0 0.0
    %151 = vmatmul.mubr.f32.gmra.mrb[0].mxu0 %v44
    %v152 = vpop.f32.mrb[0].mxu0
    %v153 = vadd.f32 0.0, %v152
    %v154 = vpop.f32.mrb[0].mxu0
    %v155 = vadd.f32 0.0, %v154
    %156 = vmatprep.mubr.f32.mxu0 0.0
    %157 = vmatmul.mubr.f32.gmra.mrb[0].mxu0 %v45
    %v158 = vpop.f32.mrb[0].mxu0
    %v159 = vadd.f32 0.0, %v158
    %v160 = vpop.f32.mrb[0].mxu0
    %v161 = vadd.f32 0.0, %v160
    %162 = vmatprep.mubr.f32.mxu0 0.0
    %163 = vmatmul.mubr.f32.gmra.mrb[0].mxu0 %v46
    %v164 = vpop.f32.mrb[0].mxu0
    %v165 = vadd.f32 0.0, %v164
    %v166 = vpop.f32.mrb[0].mxu0
    %v167 = vadd.f32 0.0, %v166
    %168 = vdwg.mxu0
    %v169 = vmul.f32 %v147, 2.0
    %v170 = vmul.f32 %v149, 2.0
    %v171 = vmul.f32 %v153, 2.0
    %v172 = vmul.f32 %v155, 2.0
    %v173 = vmul.f32 %v159, 2.0
    %v174 = vmul.f32 %v161, 2.0
    %v175 = vmul.f32 %v165, 2.0
    %v176 = vmul.f32 %v167, 2.0
    %v178 = vlaneseq
    %v179 = vshrl.u32 %v178, 7
    %v180 = vsub.s32 0, %v179
    %v181 = vrot.slane %v79, %v180
    %v182 = vlaneseq
    %v183 = vshrl.u32 %v182, 7
    %v184 = vsub.s32 1, %v183
    %v185 = vrot.slane %v79, %v184
    %v188 = vsub.f32 %v181, %v169
    %v189 = vsub.f32 %v185, %v170
    %v190 = vsub.f32 %v181, %v171
    %v191 = vsub.f32 %v185, %v172
    %v192 = vsub.f32 %v181, %v173
    %v193 = vsub.f32 %v185, %v174
    %v194 = vsub.f32 %v181, %v175
    %v195 = vsub.f32 %v185, %v176
    %v196 = vlaneseq
    %v197 = vand.u32 %v196, 127
    %v198 = vadd.s32 %v197, 128
    %vm199 = vcmp.le.f32.partialorder %v188, %v189
    %v200 = vsel %vm199, %v188, %v189
    %v201 = vsel %vm199, %v197, %v198
    %202 = vmin.index.xlane.f32.xlu0 %v200
    %v203 = vpop.xlane.xlu0 %202
    %204 = vset.pattern.permute.xlu0 %v203
    %205 = vperm.xlu0 %204, %v201
    %v206 = vpop.permute.xlu0 %205
    %vm207 = vcmp.le.f32.partialorder %v190, %v191
    %v208 = vsel %vm207, %v190, %v191
    %v209 = vsel %vm207, %v197, %v198
    %210 = vmin.index.xlane.f32.xlu0 %v208
    %v211 = vpop.xlane.xlu0 %210
    %212 = vset.pattern.permute.xlu0 %v211
    %213 = vperm.xlu0 %212, %v209
    %v214 = vpop.permute.xlu0 %213
    %vm215 = vcmp.le.f32.partialorder %v192, %v193
    %v216 = vsel %vm215, %v192, %v193
    %v217 = vsel %vm215, %v197, %v198
    %218 = vmin.index.xlane.f32.xlu0 %v216
    %v219 = vpop.xlane.xlu0 %218
    %220 = vset.pattern.permute.xlu0 %v219
    %221 = vperm.xlu0 %220, %v217
    %v222 = vpop.permute.xlu0 %221
    %vm223 = vcmp.le.f32.partialorder %v194, %v195
    %v224 = vsel %vm223, %v194, %v195
    %v225 = vsel %vm223, %v197, %v198
    %226 = vmin.index.xlane.f32.xlu0 %v224
    %v227 = vpop.xlane.xlu0 %226
    %228 = vset.pattern.permute.xlu0 %v227
    %229 = vperm.xlu0 %228, %v225
    %v230 = vpop.permute.xlu0 %229
    %vm231 = vcmp.eq.s32.totalorder %v197, %v206
    %vm232 = vcmp.eq.s32.totalorder %v198, %v206
    %vm233 = vcmp.eq.s32.totalorder %v197, %v214
    %vm234 = vcmp.eq.s32.totalorder %v198, %v214
    %vm235 = vcmp.eq.s32.totalorder %v197, %v222
    %vm236 = vcmp.eq.s32.totalorder %v198, %v222
    %vm237 = vcmp.eq.s32.totalorder %v197, %v230
    %vm238 = vcmp.eq.s32.totalorder %v198, %v230
    %v239 = vsel %vm231, 1, 0
    %v240 = vsel %vm232, 1, 0
    %v241 = vsel %vm233, 1, 0
    %v242 = vsel %vm234, 1, 0
    %v243 = vsel %vm235, 1, 0
    %v244 = vsel %vm236, 1, 0
    %v245 = vsel %vm237, 1, 0
    %v246 = vsel %vm238, 1, 0
    %v247 = vcvt.s32.f32 %v239
    %v248 = vcvt.s32.f32 %v240
    %v249 = vcvt.s32.f32 %v241
    %v250 = vcvt.s32.f32 %v242
    %v251 = vcvt.s32.f32 %v243
    %v252 = vcvt.s32.f32 %v244
    %v253 = vcvt.s32.f32 %v245
    %v254 = vcvt.s32.f32 %v246
    %255 = vmatprep.subr.mxu0 0.0
    %256 = vmatpush1.msra.mxu0 %v47
    %257 = vmatprep.subr.mxu0 0.0
    %258 = vmatpush1.msra.mxu0 %v48
    %259 = vmatprep.subr.mxu0 0.0
    %260 = vmatpush1.msra.mxu0 %v49
    %261 = vmatprep.subr.mxu0 0.0
    %262 = vmatpush1.msra.mxu0 %v50
    %263 = vmatprep.subr.mxu0 0.0
    %264 = vmatpush1.msra.mxu0 %v51
    %265 = vmatprep.subr.mxu0 0.0
    %266 = vmatpush1.msra.mxu0 %v52
    %267 = vmatprep.subr.mxu0 0.0
    %268 = vmatpush1.msra.mxu0 %v53
    %269 = vmatprep.subr.mxu0 0.0
    %270 = vmatpush1.msra.mxu0 %v54
    %271 = vmatprep.subr.mxu0 0.0
    %272 = vmatpush1.msra.mxu0 %v55
    %273 = vmatprep.subr.mxu0 0.0
    %274 = vmatpush1.msra.mxu0 %v56
    %275 = vmatprep.subr.mxu0 0.0
    %276 = vmatpush1.msra.mxu0 %v57
    %277 = vmatprep.subr.mxu0 0.0
    %278 = vmatpush1.msra.mxu0 %v58
    %279 = vmatprep.subr.mxu0 0.0
    %280 = vmatpush1.msra.mxu0 %v59
    %281 = vmatprep.subr.mxu0 0.0
    %282 = vmatpush1.msra.mxu0 %v60
    %283 = vmatprep.subr.mxu0 0.0
    %284 = vmatpush1.msra.mxu0 %v61
    %285 = vmatprep.subr.mxu0 0.0
    %286 = vmatpush1.msra.mxu0 %v62
    %287 = vmatprep.subr.mxu0 0.0
    %288 = vmatpush1.msra.mxu0 %v63
    %289 = vmatprep.subr.mxu0 0.0
    %290 = vmatpush1.msra.mxu0 %v64
    %291 = vmatprep.subr.mxu0 0.0
    %292 = vmatpush1.msra.mxu0 %v65
    %293 = vmatprep.subr.mxu0 0.0
    %294 = vmatpush1.msra.mxu0 %v66
    %295 = vmatprep.subr.mxu0 0.0
    %296 = vmatpush1.msra.mxu0 %v67
    %297 = vmatprep.subr.mxu0 0.0
    %298 = vmatpush1.msra.mxu0 %v68
    %299 = vmatprep.subr.mxu0 0.0
    %300 = vmatpush1.msra.mxu0 %v69
    %301 = vmatprep.subr.mxu0 0.0
    %302 = vmatpush1.msra.mxu0 %v70
    %303 = vmatprep.subr.mxu0 0.0
    %304 = vmatpush1.msra.mxu0 %v71
    %305 = vmatprep.subr.mxu0 0.0
    %306 = vmatpush1.msra.mxu0 %v72
    %307 = vmatprep.subr.mxu0 0.0
    %308 = vmatpush1.msra.mxu0 %v73
    %309 = vmatprep.subr.mxu0 0.0
    %310 = vmatpush1.msra.mxu0 %v74
    %311 = vmatprep.subr.mxu0 0.0
    %312 = vmatpush1.msra.mxu0 %v75
    %313 = vmatprep.subr.mxu0 0.0
    %314 = vmatpush1.msra.mxu0 %v76
    %315 = vmatprep.subr.mxu0 0.0
    %316 = vmatpush1.msra.mxu0 %v77
    %317 = vmatprep.subr.mxu0 0.0
    %318 = vmatpush1.msra.mxu0 %v78
    %319 = vmatprep.mubr.f32.mxu0 %v248
    %320 = vmatmul.mubr.f32.gmra.mrb[0].mxu0 %v247
    %v321 = vpop.f32.mrb[0].mxu0
    %v322 = vadd.f32 0.0, %v321
    %v323 = vpop.f32.mrb[0].mxu0
    %324 = vmatprep.mubr.f32.mxu0 %v250
    %325 = vmatmul.mubr.f32.gmra.mrb[0].mxu0 %v249
    %v326 = vpop.f32.mrb[0].mxu0
    %v327 = vadd.f32 0.0, %v326
    %v328 = vpop.f32.mrb[0].mxu0
    %329 = vmatprep.mubr.f32.mxu0 %v252
    %330 = vmatmul.mubr.f32.gmra.mrb[0].mxu0 %v251
    %v331 = vpop.f32.mrb[0].mxu0
    %v332 = vadd.f32 0.0, %v331
    %v333 = vpop.f32.mrb[0].mxu0
    %334 = vmatprep.mubr.f32.mxu0 %v254
    %335 = vmatmul.mubr.f32.gmra.mrb[0].mxu0 %v253
    %v336 = vpop.f32.mrb[0].mxu0
    %v337 = vadd.f32 0.0, %v336
    %v338 = vpop.f32.mrb[0].mxu0
    %339 = vdwg.mxu0
    %340 = vst [vmem:[#allocation7] sm:$0xff] %v322
    %341 = vst [vmem:[#allocation7 + $0x8] sm:$0xff] %v327
    %342 = vst [vmem:[#allocation7 + $0x10] sm:$0xff] %v332
    %343 = vst [vmem:[#allocation7 + $0x18] sm:$0xff] %v337
    // Predicated region
    $region22: #{tpu_custom_call.1} parent=1 // pred_check
      _
    $region23: #{tpu_custom_call.1} parent=1 // pred_check_branch
      %345 = sbr.rel (0) target = $region25
    $region24: #{tpu_custom_call.1} parent=1 // pred_region
      %s347 = ssub.s32 512, 512
      %348 = vsyncadd [#allocation4], %s347
      %s349 = sshll.u32 [#allocation7], 4
      %s350 = int_to_ptr.vmem [resolvable:$true] %s349
      %355 = dma.vmem_to_hbm [thread:$0]  %s350, 512, %s3, [#allocation4], 128, 128, 8
    $region25: #{tpu_custom_call.1} parent=1 // pred_fallthru
      _
    // Predicated region
    $region26: #{tpu_custom_call.1} parent=1 // pred_check
      _
    $region27: #{tpu_custom_call.1} parent=1 // pred_check_branch
      %357 = sbr.rel (0) target = $region29
    $region28: #{tpu_custom_call.1} parent=1 // pred_region
      %358 = dma.done [#allocation4], 512
    $region29: #{tpu_custom_call.1} parent=1 // pred_fallthru
      _
    %359 = vsyncpa [#allocation3], 1
    %360 = vsyncpa [#allocation6], 1
    %361 = vsyncpa [#allocation4], 1

</llo_original>
